<compile_context>
chip_gen: v6e
topology: v6e:2x2x1
jax: 0.10.0
libtpu: 0.0.40
codegen_flags: <defaults>
</compile_context>

<pallas_src>
import functools

import jax
import jax.numpy as jnp
from jax.experimental import pallas as pl
from jax.experimental.pallas import tpu as pltpu


EPS = 1e-6


def _round_up(a, b):
    return (a + b - 1) // b * b


# ----------------------------------------------------------------------------
# Pallas kernel: one block of rows, fully vectorised.
# ----------------------------------------------------------------------------
def basis_extraction_kernel(x_ref, ks_ref, o_ref, *, true_t):
    bk, t_pad = x_ref.shape
    L = o_ref.shape[-1]

    x = x_ref[...].astype(jnp.float32)       # (bk, Tp) rows (lane-padded)
    kk = ks_ref[:, 0:1]                      # (bk, 1) steepness
    si = ks_ref[:, 1:2]                      # (bk, 1) continuous start index

    # round-half-to-even (matches torch.round), clamp to the valid slice range
    # [0, T-L] (matches lax.dynamic_slice clamping used by the reference).
    hi = max(true_t - L, 0)
    si_int = jnp.clip(jnp.round(si).astype(jnp.int32), 0, hi)   # (bk, 1)
    si_c = si_int.astype(jnp.float32)

    # ---- window evaluated directly at output positions t = si_int + j ------
    j = jax.lax.broadcasted_iota(jnp.int32, (bk, L), 1).astype(jnp.float32)
    t_out = si_c + j
    u1 = t_out - si - EPS
    u2 = t_out - si - float(L) - EPS
    # sigmoid(softplus(z)) == 1 - 1/(2 + exp(z))  (overflow-safe in f32)
    g1 = 1.0 - 1.0 / (2.0 + jnp.exp(kk * u1))
    g2 = 1.0 - 1.0 / (2.0 + jnp.exp(kk * u2))
    window = 2.0 * (g1 - g2)                                    # (bk, L)

    # ---- gather x[i, si_int[i] + j]: log2 fixed-amount rolls + bit select ---
    # Left-rotate the whole block by 2^b lanes (XLU) and keep it only for the
    # rows whose si_int has bit b set. si_int + j <= T-1 < Tp, so circular
    # wrap-around never reaches the first L lanes we read.
    shifted = x
    if hi > 0:
        for b in range(hi.bit_length()):
            amt = 1 << b
            rolled = pltpu.roll(shifted, t_pad - amt, axis=1)   # left-rotate by amt
            take = (si_int & amt) != 0                          # (bk, 1) bool
            shifted = jnp.where(take, rolled, shifted)
    xg = shifted[:, :L]                                         # (bk, L)

    o_ref[...] = (xg * window).astype(o_ref.dtype)


# ----------------------------------------------------------------------------
# Wrapper
# ----------------------------------------------------------------------------
@functools.partial(jax.jit, static_argnames=("out_dim",))
def basis_extraction_forward(x, k_param, start_idx, *, out_dim):
    """x: (K, T); k_param, start_idx: (K,). Returns (K, out_dim) in x.dtype."""
    K, T = x.shape
    L = out_dim

    # pack the two per-row scalars into one tiny f32 operand -> one DMA stream
    ks = jnp.stack([k_param.astype(jnp.float32),
                    start_idx.astype(jnp.float32)], axis=-1)     # (K, 2)

    # pad rows to the sublane tile (8) and lanes to the lane tile (128)
    Kp = _round_up(K, 8)
    Tp = _round_up(T, 128)

    # row-block: cap at 256 rows/block, and use >=2 parallel grid steps when
    # K >= 16 so both TensorCores on v7x get work (extra step is ~0.35us on
    # single-TC chips, negligible).
    if Kp >= 16:
        bk = min(256, _round_up(pl.cdiv(Kp, 2), 8))
    else:
        bk = Kp
    Kp = _round_up(Kp, bk)
    grid = (Kp // bk,)

    x_p = jnp.pad(x, ((0, Kp - K), (0, Tp - T)))
    ks_p = jnp.pad(ks, ((0, Kp - K), (0, 0)))

    kernel = functools.partial(basis_extraction_kernel, true_t=T)

    nbits = max(1, max(T - L, 1).bit_length())
    cost = pl.CostEstimate(
        flops=int(Kp * L * 14 + Kp * Tp * 3 * nbits),
        transcendentals=int(2 * Kp * L),
        bytes_accessed=int(x.dtype.itemsize * Kp * Tp
                           + 4 * Kp * 2
                           + x.dtype.itemsize * Kp * L),
    )

    out = pl.pallas_call(
        kernel,
        out_shape=jax.ShapeDtypeStruct((Kp, L), x.dtype),
        grid_spec=pltpu.PrefetchScalarGridSpec(
            num_scalar_prefetch=0,
            grid=grid,
            in_specs=[
                pl.BlockSpec((bk, Tp), lambda i: (i, 0)),   # x rows (lane-padded)
                pl.BlockSpec((bk, 2), lambda i: (i, 0)),    # packed (k, start_idx)
            ],
            out_specs=pl.BlockSpec((bk, L), lambda i: (i, 0)),
        ),
        compiler_params=pltpu.CompilerParams(
            dimension_semantics=("parallel",)),
        cost_estimate=cost,
    )(x_p, ks_p)
    return out[:K]


# ----------------------------------------------------------------------------
# Deterministic parameter init, matching SigmoidDiffWindow2D.__init__:
#   k = 3 + 7 * rand(K);  start_idx = 0.5 * (tanh(rand(K)) + 1) * (T - L - 1)
# ----------------------------------------------------------------------------
def init_params(key, in_dim, out_dim, temporal_basis_number, dtype=jnp.float32):
    K, T, L = temporal_basis_number, in_dim, out_dim
    kk, ks = jax.random.split(key)
    k_param = 3.0 + (10.0 - 3.0) * jax.random.uniform(kk, (K,), dtype)
    start_idx = 0.5 * (jnp.tanh(jax.random.uniform(ks, (K,), dtype)) + 1.0) * (T - L - 1)
    return k_param, start_idx


def reference_forward(x, k_param, start_idx, out_dim):
    """Pure-JAX transcription of the PyTorch forward (full-T window + slice)."""
    K, T = x.shape
    L = out_dim
    t = jnp.arange(T, dtype=jnp.float32)[None, :]
    kk = k_param[:, None]
    si = start_idx[:, None]

    def gate(u):                      # sigmoid(softplus(k*u)), stable softplus
        z = kk * u
        sp = jnp.maximum(z, 0.0) + jnp.log1p(jnp.exp(-jnp.abs(z)))
        return 1.0 / (1.0 + jnp.exp(-sp))

    window = 2.0 * (gate(t - (si + EPS)) - gate(t - (si + L + EPS)))
    weighted = x.astype(jnp.float32) * window
    si_int = jnp.round(start_idx).astype(jnp.int32)
    rows = [jax.lax.dynamic_slice_in_dim(weighted[i], si_int[i], L)
            for i in range(K)]
    return jnp.stack(rows, axis=0)


if __name__ == "__main__":
    # BasisExtractionModule(in_dim=16, out_dim=8, temporal_basis_number=8)
    in_dim, out_dim, temporal_basis_number = 16, 8, 8

    key = jax.random.PRNGKey(0)
    kx, kp = jax.random.split(key)

    x = jax.random.normal(kx, (temporal_basis_number, in_dim), jnp.float32)
    k_param, start_idx = init_params(kp, in_dim, out_dim, temporal_basis_number)

    y = basis_extraction_forward(x, k_param, start_idx, out_dim=out_dim)
    y = jax.block_until_ready(y)

    y_ref = reference_forward(x, k_param, start_idx, out_dim)
    assert y.shape == (temporal_basis_number, out_dim)
    err = float(jnp.max(jnp.abs(y.astype(jnp.float32) - y_ref)))
    assert err < 1e-4, "max abs err = %g" % err

    print("KERNEL_OK")
</pallas_src>

<mosaic_0001>
module attributes {stable_mosaic.version = 11 : i64} {
  func.func @basis_extraction_kernel(%arg0: i32, %arg1: memref<8x128xf32, #tpu.memory_space<vmem>>, %arg2: memref<8x2xf32, #tpu.memory_space<vmem>>, %arg3: memref<8x8xf32, #tpu.memory_space<vmem>>) attributes {dimension_semantics = [#tpu.dimension_semantics<parallel>], iteration_bounds = array<i64: 1>, scalar_prefetch = 0 : i64, scratch_operands = 0 : i64, tpu.core_type = #tpu.core_type<tc>, window_params = [{transform_indices = @transform_0, window_bounds = array<i64: 8, 128>}, {transform_indices = @transform_1, window_bounds = array<i64: 8, 2>}, {transform_indices = @transform_2, window_bounds = array<i64: 8, 8>}]} {
    %c0 = arith.constant 0 : index
    %c0_0 = arith.constant 0 : index
    %0 = vector.load %arg1[%c0, %c0_0] : memref<8x128xf32, #tpu.memory_space<vmem>>, vector<8x128xf32>
    %c0_1 = arith.constant 0 : index
    %c0_2 = arith.constant 0 : index
    %1 = vector.load %arg2[%c0_1, %c0_2] : memref<8x2xf32, #tpu.memory_space<vmem>>, vector<8x1xf32>
    %c0_3 = arith.constant 0 : index
    %c1 = arith.constant 1 : index
    %2 = vector.load %arg2[%c0_3, %c1] : memref<8x2xf32, #tpu.memory_space<vmem>>, vector<8x1xf32>
    %3 = math.roundeven %2 : vector<8x1xf32>
    %4 = arith.fptosi %3 : vector<8x1xf32> to vector<8x1xi32>
    %c0_i32 = arith.constant 0 : i32
    %c8_i32 = arith.constant 8 : i32
    %5 = vector.broadcast %c0_i32 : i32 to vector<8x1xi32>
    %6 = arith.maxsi %5, %4 : vector<8x1xi32>
    %7 = vector.broadcast %c8_i32 : i32 to vector<8x1xi32>
    %8 = arith.minsi %7, %6 : vector<8x1xi32>
    %9 = arith.sitofp %8 : vector<8x1xi32> to vector<8x1xf32>
    %10 = tpu.iota {dimensions = array<i32: 1>} : vector<8x8xi32>
    %11 = arith.sitofp %10 : vector<8x8xi32> to vector<8x8xf32>
    %12 = vector.broadcast %9 : vector<8x1xf32> to vector<8x8xf32>
    %13 = arith.addf %12, %11 : vector<8x8xf32>
    %14 = vector.broadcast %2 : vector<8x1xf32> to vector<8x8xf32>
    %15 = arith.subf %13, %14 : vector<8x8xf32>
    %cst = arith.constant 9.99999997E-7 : f32
    %16 = vector.broadcast %cst : f32 to vector<8x8xf32>
    %17 = arith.subf %15, %16 : vector<8x8xf32>
    %18 = vector.broadcast %2 : vector<8x1xf32> to vector<8x8xf32>
    %19 = arith.subf %13, %18 : vector<8x8xf32>
    %cst_4 = arith.constant 8.000000e+00 : f32
    %20 = vector.broadcast %cst_4 : f32 to vector<8x8xf32>
    %21 = arith.subf %19, %20 : vector<8x8xf32>
    %cst_5 = arith.constant 9.99999997E-7 : f32
    %22 = vector.broadcast %cst_5 : f32 to vector<8x8xf32>
    %23 = arith.subf %21, %22 : vector<8x8xf32>
    %24 = vector.broadcast %1 : vector<8x1xf32> to vector<8x8xf32>
    %25 = arith.mulf %24, %17 : vector<8x8xf32>
    %26 = math.exp %25 : vector<8x8xf32>
    %cst_6 = arith.constant 2.000000e+00 : f32
    %27 = vector.broadcast %cst_6 : f32 to vector<8x8xf32>
    %28 = arith.addf %27, %26 : vector<8x8xf32>
    %cst_7 = arith.constant 1.000000e+00 : f32
    %29 = vector.broadcast %cst_7 : f32 to vector<8x8xf32>
    %30 = arith.divf %29, %28 : vector<8x8xf32>
    %cst_8 = arith.constant 1.000000e+00 : f32
    %31 = vector.broadcast %cst_8 : f32 to vector<8x8xf32>
    %32 = arith.subf %31, %30 : vector<8x8xf32>
    %33 = vector.broadcast %1 : vector<8x1xf32> to vector<8x8xf32>
    %34 = arith.mulf %33, %23 : vector<8x8xf32>
    %35 = math.exp %34 : vector<8x8xf32>
    %cst_9 = arith.constant 2.000000e+00 : f32
    %36 = vector.broadcast %cst_9 : f32 to vector<8x8xf32>
    %37 = arith.addf %36, %35 : vector<8x8xf32>
    %cst_10 = arith.constant 1.000000e+00 : f32
    %38 = vector.broadcast %cst_10 : f32 to vector<8x8xf32>
    %39 = arith.divf %38, %37 : vector<8x8xf32>
    %cst_11 = arith.constant 1.000000e+00 : f32
    %40 = vector.broadcast %cst_11 : f32 to vector<8x8xf32>
    %41 = arith.subf %40, %39 : vector<8x8xf32>
    %42 = arith.subf %32, %41 : vector<8x8xf32>
    %cst_12 = arith.constant 2.000000e+00 : f32
    %43 = vector.broadcast %cst_12 : f32 to vector<8x8xf32>
    %44 = arith.mulf %43, %42 : vector<8x8xf32>
    %c127_i32 = arith.constant 127 : i32
    %45 = tpu.dynamic_rotate %0 by %c127_i32 dim 1 : vector<8x128xf32>, i32 -> vector<8x128xf32>
    %c1_i32 = arith.constant 1 : i32
    %46 = vector.broadcast %c1_i32 : i32 to vector<8x1xi32>
    %47 = arith.andi %8, %46 : vector<8x1xi32>
    %c0_i32_13 = arith.constant 0 : i32
    %48 = vector.broadcast %c0_i32_13 : i32 to vector<8x1xi32>
    %49 = arith.cmpi ne, %47, %48 : vector<8x1xi32>
    %50 = vector.shape_cast %49 : vector<8x1xi1> to vector<8x1xi1>
    %51 = vector.broadcast %50 : vector<8x1xi1> to vector<8x128xi1>
    %52 = arith.select %51, %45, %0 : vector<8x128xi1>, vector<8x128xf32>
    %c126_i32 = arith.constant 126 : i32
    %53 = tpu.dynamic_rotate %52 by %c126_i32 dim 1 : vector<8x128xf32>, i32 -> vector<8x128xf32>
    %c2_i32 = arith.constant 2 : i32
    %54 = vector.broadcast %c2_i32 : i32 to vector<8x1xi32>
    %55 = arith.andi %8, %54 : vector<8x1xi32>
    %c0_i32_14 = arith.constant 0 : i32
    %56 = vector.broadcast %c0_i32_14 : i32 to vector<8x1xi32>
    %57 = arith.cmpi ne, %55, %56 : vector<8x1xi32>
    %58 = vector.shape_cast %57 : vector<8x1xi1> to vector<8x1xi1>
    %59 = vector.broadcast %58 : vector<8x1xi1> to vector<8x128xi1>
    %60 = arith.select %59, %53, %52 : vector<8x128xi1>, vector<8x128xf32>
    %c124_i32 = arith.constant 124 : i32
    %61 = tpu.dynamic_rotate %60 by %c124_i32 dim 1 : vector<8x128xf32>, i32 -> vector<8x128xf32>
    %c4_i32 = arith.constant 4 : i32
    %62 = vector.broadcast %c4_i32 : i32 to vector<8x1xi32>
    %63 = arith.andi %8, %62 : vector<8x1xi32>
    %c0_i32_15 = arith.constant 0 : i32
    %64 = vector.broadcast %c0_i32_15 : i32 to vector<8x1xi32>
    %65 = arith.cmpi ne, %63, %64 : vector<8x1xi32>
    %66 = vector.shape_cast %65 : vector<8x1xi1> to vector<8x1xi1>
    %67 = vector.broadcast %66 : vector<8x1xi1> to vector<8x128xi1>
    %68 = arith.select %67, %61, %60 : vector<8x128xi1>, vector<8x128xf32>
    %c120_i32 = arith.constant 120 : i32
    %69 = tpu.dynamic_rotate %68 by %c120_i32 dim 1 : vector<8x128xf32>, i32 -> vector<8x128xf32>
    %c8_i32_16 = arith.constant 8 : i32
    %70 = vector.broadcast %c8_i32_16 : i32 to vector<8x1xi32>
    %71 = arith.andi %8, %70 : vector<8x1xi32>
    %c0_i32_17 = arith.constant 0 : i32
    %72 = vector.broadcast %c0_i32_17 : i32 to vector<8x1xi32>
    %73 = arith.cmpi ne, %71, %72 : vector<8x1xi32>
    %74 = vector.shape_cast %73 : vector<8x1xi1> to vector<8x1xi1>
    %75 = vector.broadcast %74 : vector<8x1xi1> to vector<8x128xi1>
    %76 = arith.select %75, %69, %68 : vector<8x128xi1>, vector<8x128xf32>
    %77 = vector.extract_strided_slice %76 {offsets = [0, 0], sizes = [8, 8], strides = [1, 1]} : vector<8x128xf32> to vector<8x8xf32>
    %78 = arith.mulf %77, %44 : vector<8x8xf32>
    %c0_18 = arith.constant 0 : index
    %c0_19 = arith.constant 0 : index
    %79 = vector.load %arg3[%c0_18, %c0_19] : memref<8x8xf32, #tpu.memory_space<vmem>>, vector<8x8xf32>
    tpu.vector_store %arg3[%c0_18, %c0_19], %78 {strides = array<i32>} : memref<8x8xf32, #tpu.memory_space<vmem>>, vector<8x8xf32>,
    return
  }
  func.func @transform_0(%arg0: i32) -> (i32, i32) {
    %c0_i32 = arith.constant 0 : i32
    %c0_i32_0 = arith.constant 0 : i32
    return %arg0, %c0_i32 : i32, i32
  }
  func.func @transform_1(%arg0: i32) -> (i32, i32) {
    %c0_i32 = arith.constant 0 : i32
    %c0_i32_0 = arith.constant 0 : i32
    return %arg0, %c0_i32 : i32, i32
  }
  func.func @transform_2(%arg0: i32) -> (i32, i32) {
    %c0_i32 = arith.constant 0 : i32
    %c0_i32_0 = arith.constant 0 : i32
    return %arg0, %c0_i32 : i32, i32
  }
}

</mosaic_0001>

<llo_original>
// kernel: basis_extraction_forward.1
$region0: #{basis_extraction_forward.1}
  #allocation0 [shape = 'u32[]', space=smem, size = 0x4, offset = 0x4, fixed_abs, tag = 'smem constant byte address 0x4 - core index']
  #allocation1 [shape = 'u32[144,128]{1,0:T(1,128)}', space=vmem, size = 0x12000, scoped, tag = 'internal scratch']
  %s0 = inlined_call_operand.vmem [shape: f32[8,128], index: 0, kind: input, shape index: {}]
  %s1 = inlined_call_operand.vmem [shape: f32[8,2], index: 1, kind: input, shape index: {}]
  %s2 = inlined_call_operand.hbm [shape: f32[8,8], index: 2, kind: output, shape index: {}]
  %s3 = sld [smem:[#allocation0]]
  $region18: #{basis_extraction_forward.1} parent=0
    _
  %s5 = ssub.s32 1, %s3
  %s6 = scalar_select 0, %s5, %s3
  $region1: #{basis_extraction_forward.1} parent=0
    #allocation2 [shape = 'u8[4096]{0}', space=vmem, size = 0x1000, scoped, tag = 'output window, operand 0, single buffered']
    #allocation3 [shape = 's32[1]{0}', space=sflag, size = 0x4, scoped, tag = 'scoped memory for basis_extraction_forward.1']
    %7 = vsyncpa [#allocation3], 0
    // Predicated region
    $region2: #{basis_extraction_forward.1} parent=1 // pred_check
      _
    $region3: #{basis_extraction_forward.1} parent=1 // pred_check_branch
      %9 = sbr.rel (0) target = $region5
    $region4: #{basis_extraction_forward.1} parent=1 // pred_region
      _
    $region5: #{basis_extraction_forward.1} parent=1 // pred_fallthru
      _
    // Predicated region
    $region6: #{basis_extraction_forward.1} parent=1 // pred_check
      _
    $region7: #{basis_extraction_forward.1} parent=1 // pred_check_branch
      %11 = sbr.rel (0) target = $region9
    $region8: #{basis_extraction_forward.1} parent=1 // pred_region
      _
    $region9: #{basis_extraction_forward.1} parent=1 // pred_fallthru
      _
    %v12 = vld [vmem:[%s0] sm:$0xff]
    %v13 = vld [vmem:[%s1] sm:$0xff]
    %v14 = vcvt.f32.s32.ties.to.even %v13
    %vm15 = vcmp.gt.s32.totalorder %v14, 0
    %v16 = vsel %vm15, %v14, 0
    %vm17 = vcmp.lt.s32.totalorder %v16, 8
    %v18 = vsel %vm17, %v16, 8
    %v19 = vcvt.s32.f32 %v18
    %v20 = vlaneseq
    %v21 = vand.u32 %v20, 127
    %v22 = vcvt.s32.f32 %v21
    %24 = vset.pattern.permute.xlu0 1
    %25 = vperm.xlu0 %24, %v19
    %v26 = vpop.permute.xlu0 %25
    %v28 = vadd.f32 %v26, %v22
    %30 = vset.pattern.permute.xlu0 1
    %31 = vperm.xlu0 %30, %v13
    %v32 = vpop.permute.xlu0 %31
    %v34 = vsub.f32 %v28, %v32
    %v35 = vsub.f32 %v34, 1e-06
    %v36 = vsub.f32 %v34, 8.0
    %v37 = vsub.f32 %v36, 1e-06
    %38 = vset.pattern.permute.xlu0 0
    %39 = vperm.xlu0 %38, %v13
    %v40 = vpop.permute.xlu0 %39
    %v42 = vmul.f32 %v40, %v35
    %v43 = vmul.f32 %v42, 1.442695
    %v44 = vpow.pop %v43
    %v45 = vadd.f32 %v44, 2.0
    %v46 = vrcp.pop %v45
    %v47 = vmul.f32 1.0, %v46
    %v48 = vsub.f32 1.0, %v47
    %v49 = vmul.f32 %v40, %v37
    %v50 = vmul.f32 %v49, 1.442695
    %v51 = vpow.pop %v50
    %v52 = vadd.f32 %v51, 2.0
    %v53 = vrcp.pop %v52
    %v54 = vmul.f32 1.0, %v53
    %v55 = vsub.f32 1.0, %v54
    %v56 = vsub.f32 %v48, %v55
    %v57 = vmul.f32 %v56, 2.0
    %58 = vrot.lane.b32.xlu0 %v12, 127
    %v59 = vpop.permute.xlu0 %58
    %v60 = vand.u32 %v18, 1
    %vm61 = vcmp.ne.s32.totalorder %v60, 0
    %v62 = vsel %vm61, 1, 0
    %63 = vset.pattern.permute.xlu0 1
    %64 = vperm.xlu0 %63, %v62
    %v65 = vpop.permute.xlu0 %64
    %vm66 = vcmp.eq.s32.totalorder %v65, 1
    %v67 = vsel %vm66, %v59, %v12
    %68 = vrot.lane.b32.xlu0 %v67, 126
    %v69 = vpop.permute.xlu0 %68
    %v70 = vand.u32 %v18, 2
    %vm71 = vcmp.ne.s32.totalorder %v70, 0
    %v72 = vsel %vm71, 1, 0
    %73 = vset.pattern.permute.xlu0 1
    %74 = vperm.xlu0 %73, %v72
    %v75 = vpop.permute.xlu0 %74
    %vm76 = vcmp.eq.s32.totalorder %v75, 1
    %v77 = vsel %vm76, %v69, %v67
    %78 = vrot.lane.b32.xlu0 %v77, 124
    %v79 = vpop.permute.xlu0 %78
    %v80 = vand.u32 %v18, 4
    %vm81 = vcmp.ne.s32.totalorder %v80, 0
    %v82 = vsel %vm81, 1, 0
    %83 = vset.pattern.permute.xlu0 1
    %84 = vperm.xlu0 %83, %v82
    %v85 = vpop.permute.xlu0 %84
    %vm86 = vcmp.eq.s32.totalorder %v85, 1
    %v87 = vsel %vm86, %v79, %v77
    %88 = vrot.lane.b32.xlu0 %v87, 120
    %v89 = vpop.permute.xlu0 %88
    %v90 = vand.u32 %v18, 8
    %vm91 = vcmp.ne.s32.totalorder %v90, 0
    %v92 = vsel %vm91, 1, 0
    %93 = vset.pattern.permute.xlu0 1
    %94 = vperm.xlu0 %93, %v92
    %v95 = vpop.permute.xlu0 %94
    %vm96 = vcmp.eq.s32.totalorder %v95, 1
    %v97 = vsel %vm96, %v89, %v87
    %v98 = vmul.f32 %v97, %v57
    %vm99 = vcmask 64512
    %100 = vst.msk [vmem:[#allocation2] sm:$0xff] %vm99, %v98
    // Predicated region
    $region10: #{basis_extraction_forward.1} parent=1 // pred_check
      _
    $region11: #{basis_extraction_forward.1} parent=1 // pred_check_branch
      %102 = sbr.rel (0) target = $region13
    $region12: #{basis_extraction_forward.1} parent=1 // pred_region
      %s104 = ssub.s32 128, 128
      %105 = vsyncadd [#allocation3], %s104
      %s107 = sshll.u32 [#allocation2], 4
      %s108 = int_to_ptr.vmem [resolvable:$true] %s107
      %110 = dma.vmem_to_hbm [thread:$0]  %s108, 128, %s2, [#allocation3]
    $region13: #{basis_extraction_forward.1} parent=1 // pred_fallthru
      _
    // Predicated region
    $region14: #{basis_extraction_forward.1} parent=1 // pred_check
      _
    $region15: #{basis_extraction_forward.1} parent=1 // pred_check_branch
      %112 = sbr.rel (0) target = $region17
    $region16: #{basis_extraction_forward.1} parent=1 // pred_region
      %113 = dma.done [#allocation3], 128
    $region17: #{basis_extraction_forward.1} parent=1 // pred_fallthru
      _
    %114 = vsyncpa [#allocation3], 1

</llo_original>
